<compile_context>
chip_gen: v7x
topology: tpu7x:2x2x1
jax: 0.10.0
libtpu: 0.0.40
codegen_flags: <defaults>
</compile_context>

<pallas_src>
import functools

import jax
import jax.numpy as jnp
from jax.experimental import pallas as pl
from jax.experimental.pallas import tpu as pltpu


def _round_up(x, m):
    return ((x + m - 1) // m) * m


def _vmem_capacity_bytes():
    try:
        return int(pltpu.get_tpu_info().vmem_capacity_bytes)
    except Exception:
        return 64 << 20  # conservative fallback: v7x per-TC VMEM


def _pick_tile(bs, C, T, itemsize, vmem_cap):
    """Largest batch tile whose double-buffered footprint fits the VMEM budget."""
    sublane = max(8, 32 // itemsize)              # 8 rows f32, 16 rows bf16
    budget = min(48 << 20, (vmem_cap * 3) // 4)   # keep headroom below physical
    # Per-row bytes: double-buffered (T+1) input blocks + w + f32 temporaries
    # (running target-softmax accumulator, exp tile, diff tile, ...).
    per_row = 2 * (T + 1) * C * itemsize + 2 * 4 + 6 * C * 4
    tb = budget // per_row
    tb = min(tb, (4 << 20) // max(1, C * itemsize))   # <= ~4 MiB per input block
    tb = max(sublane, (tb // sublane) * sublane)
    tb = min(tb, _round_up(bs, sublane))
    # TODO(synk): if even tb == sublane does not fit (very large C), restructure
    # to a 2-D grid with C-chunks + online softmax instead of full-row blocks.
    return max(sublane, tb)


def _softmax_rows(x, scale=1.0):
    """Row softmax (last axis), exact divide; `scale` folded into the (tb,1) inv."""
    m = jnp.max(x, axis=-1, keepdims=True)
    e = jnp.exp(x - m)
    inv = scale / jnp.sum(e, axis=-1, keepdims=True)   # exact, per-row vector op
    return e * inv


def _class_pseudo_loss_kernel(num_targets, bs, tb, preds_ref, w_ref, *rest):
    target_refs = rest[:num_targets]
    loss_ref = rest[num_targets]
    n_ref = rest[num_targets + 1]

    C = preds_ref.shape[-1]

    # Running sum of the T target softmaxes: peak live intermediate is one
    # (tb, C) f32 tile instead of (T, tb, C).
    t_acc = _softmax_rows(target_refs[0][...].astype(jnp.float32))
    for t_ref in target_refs[1:]:
        t_acc = t_acc + _softmax_rows(t_ref[...].astype(jnp.float32))

    # Fold the 1/T mean into the preds softmax normalization (row-vector op):
    # mean_C((p_sm - t_acc/T)^2) == sum_C((T*p_sm - t_acc)^2) / (T^2 * C).
    preds_sm_T = _softmax_rows(preds_ref[...].astype(jnp.float32),
                               scale=float(num_targets))

    diff = preds_sm_T - t_acc
    sq_row = jnp.sum(diff * diff, axis=-1, keepdims=True)        # (tb, 1)

    w = w_ref[...].astype(jnp.float32)                           # (tb, 1)
    row_scale = jnp.float32(1.0 / (float(num_targets) ** 2 * C))

    # Tail mask: grid = cdiv(bs, tb); rows past bs hold garbage (softmax may be
    # NaN/Inf) -> mask with a select, never by multiplying with a zero weight.
    row_ids = pl.program_id(0) * tb + jax.lax.broadcasted_iota(
        jnp.int32, (tb, 1), 0)
    row_valid = row_ids < bs

    loss_rows = jnp.where(row_valid, sq_row * (w * row_scale), 0.0)
    n_rows = (row_valid & (w > 0.0)).astype(jnp.int32)

    # Per-block partial sums, written as lane-dense slabs (batch axis is
    # "parallel": no cross-step state, so the grid can shard across TCs).
    loss_ref[...] = jnp.full(loss_ref.shape, jnp.sum(loss_rows), jnp.float32)
    n_ref[...] = jnp.full(n_ref.shape, jnp.sum(n_rows), jnp.int32)


def class_pseudo_loss(preds, targets_list, sample_weight, *, tb=None,
                      input_dtype=None):
    """preds: (bs, C); targets_list: list of T (bs, C); sample_weight: (bs,) or (bs, 1).

    input_dtype=jnp.bfloat16 halves HBM read traffic (rounds logits before the
    softmax; gate on the caller's tolerance). All in-kernel math is f32.
    """
    bs, C = preds.shape
    T = len(targets_list)

    if input_dtype is not None:
        preds = preds.astype(input_dtype)
        targets_list = [t.astype(input_dtype) for t in targets_list]

    itemsize = jnp.dtype(preds.dtype).itemsize
    sublane = max(8, 32 // itemsize)
    vmem_cap = _vmem_capacity_bytes()

    if tb is None:
        tb = _pick_tile(bs, C, T, itemsize, vmem_cap)
    else:
        tb = max(sublane, _round_up(min(tb, _round_up(bs, sublane)), sublane))

    num_blocks = pl.cdiv(bs, tb)

    # Only the tiny weight vector is reshaped; the (T+1) large inputs are fed
    # to the kernel unpadded (the tail block is masked in-kernel).
    w = jnp.reshape(jnp.asarray(sample_weight), (bs, 1)).astype(jnp.float32)

    # TODO(synk): for C < 128 (lane under-utilization) a sublane-major layout
    # (class dim on sublanes / row packing) would use the VPU/EUP fully; kept
    # lane-major here since the kernel is HBM-bound at these shapes.
    row_spec = pl.BlockSpec((tb, C), lambda i: (i, 0))
    w_spec = pl.BlockSpec((tb, 1), lambda i: (i, 0))
    part_spec = pl.BlockSpec((1, 1, 128), lambda i: (i, 0, 0))

    footprint = (2 * (T + 1) * tb * C * itemsize   # double-buffered input blocks
                 + 2 * tb * 4                      # w blocks
                 + 6 * tb * C * 4                  # f32 temporaries
                 + 2 * 2 * 128 * 4)                # partial-sum output slabs
    vmem_limit = int(min(vmem_cap, max(32 << 20, footprint + (4 << 20))))

    cost = pl.CostEstimate(
        flops=6 * (T + 2) * bs * C,
        transcendentals=(T + 1) * bs * C,
        bytes_accessed=(T + 1) * bs * C * itemsize + bs * 4
        + 2 * num_blocks * 128 * 4,
    )

    # TODO(synk): on v5e, if DMA is still exposed after the larger tb, bump the
    # row specs to pipeline_mode=pl.Buffered(3) (extra VMEM buffer per input).
    loss_parts, n_parts = pl.pallas_call(
        functools.partial(_class_pseudo_loss_kernel, T, bs, tb),
        grid=(num_blocks,),
        in_specs=[row_spec, w_spec] + [row_spec] * T,
        out_specs=(part_spec, part_spec),
        out_shape=(
            jax.ShapeDtypeStruct((num_blocks, 1, 128), jnp.float32),
            jax.ShapeDtypeStruct((num_blocks, 1, 128), jnp.int32),
        ),
        compiler_params=pltpu.CompilerParams(
            dimension_semantics=("parallel",),
            vmem_limit_bytes=vmem_limit),
        cost_estimate=cost,
    )(preds, w, *targets_list)

    loss = jnp.sum(loss_parts[:, 0, 0])
    n = jnp.sum(n_parts[:, 0, 0]).astype(jnp.int32)
    return loss, n


def _reference(preds, targets_list, sample_weight):
    def softmax(x):
        x = x - jnp.max(x, axis=-1, keepdims=True)
        e = jnp.exp(x)
        return e / jnp.sum(e, axis=-1, keepdims=True)

    t_sm = jnp.mean(jnp.stack([softmax(t) for t in targets_list], axis=0), axis=0)
    p_sm = softmax(preds)
    w = jnp.reshape(jnp.asarray(sample_weight), (-1,))
    loss = jnp.mean((p_sm - t_sm) ** 2, axis=-1) * w
    n = jnp.sum((w > 0).astype(jnp.int32))
    return loss.sum(), n


if __name__ == "__main__":
    key = jax.random.PRNGKey(0)
    bs, C, T = 20, 32, 3          # bs deliberately not a multiple of the tile
    k1, k2, k3 = jax.random.split(key, 3)

    preds = jax.random.normal(k1, (bs, C), dtype=jnp.float32)
    targets_list = [
        jax.random.normal(jax.random.fold_in(k2, t), (bs, C), dtype=jnp.float32)
        for t in range(T)
    ]
    w_vals = jax.random.uniform(k3, (bs,), dtype=jnp.float32)
    # Zero out some weights so n < bs.
    sample_weight = jnp.where(w_vals > 0.4, w_vals, 0.0).reshape(bs, 1)

    ref_loss, ref_n = _reference(preds, targets_list, sample_weight)

    # 1) Auto tile-size path (single block, in-kernel tail mask covers bs=20).
    loss, n = class_pseudo_loss(preds, targets_list, sample_weight)
    jax.block_until_ready((loss, n))
    assert jnp.allclose(loss, ref_loss, rtol=1e-4, atol=1e-5), (loss, ref_loss)
    assert int(n) == int(ref_n), (n, ref_n)

    # 2) tb=8 exercises the multi-step "parallel" grid + partial tail block.
    loss2, n2 = class_pseudo_loss(preds, targets_list, sample_weight, tb=8)
    jax.block_until_ready((loss2, n2))
    assert jnp.allclose(loss2, ref_loss, rtol=1e-4, atol=1e-5), (loss2, ref_loss)
    assert int(n2) == int(ref_n), (n2, ref_n)

    print("KERNEL_OK")
</pallas_src>

<mosaic_0001>
module attributes {stable_mosaic.version = 11 : i64} {
  func.func @_class_pseudo_loss_kernel(%arg0: i32, %arg1: memref<24x32xf32, #tpu.memory_space<vmem>>, %arg2: memref<24x1xf32, #tpu.memory_space<vmem>>, %arg3: memref<24x32xf32, #tpu.memory_space<vmem>>, %arg4: memref<24x32xf32, #tpu.memory_space<vmem>>, %arg5: memref<24x32xf32, #tpu.memory_space<vmem>>, %arg6: memref<1x1x128xf32, #tpu.memory_space<vmem>>, %arg7: memref<1x1x128xi32, #tpu.memory_space<vmem>>) attributes {dimension_semantics = [#tpu.dimension_semantics<parallel>], iteration_bounds = array<i64: 1>, scalar_prefetch = 0 : i64, scratch_operands = 0 : i64, tpu.core_type = #tpu.core_type<tc>, window_params = [{transform_indices = @transform_0, window_bounds = array<i64: 24, 32>}, {transform_indices = @transform_1, window_bounds = array<i64: 24, 1>}, {transform_indices = @transform_2, window_bounds = array<i64: 24, 32>}, {transform_indices = @transform_3, window_bounds = array<i64: 24, 32>}, {transform_indices = @transform_4, window_bounds = array<i64: 24, 32>}, {transform_indices = @transform_5, window_bounds = array<i64: 1, 1, 128>}, {transform_indices = @transform_6, window_bounds = array<i64: 1, 1, 128>}]} {
    %c0 = arith.constant 0 : index
    %c0_0 = arith.constant 0 : index
    %0 = vector.load %arg3[%c0, %c0_0] : memref<24x32xf32, #tpu.memory_space<vmem>>, vector<24x32xf32>
    %cst = arith.constant dense<0xFF800000> : vector<24xf32>
    %1 = vector.multi_reduction <maximumf>, %0, %cst [1] : vector<24x32xf32> to vector<24xf32>
    %2 = vector.shape_cast %1 : vector<24xf32> to vector<24x1xf32>
    %3 = vector.broadcast %2 : vector<24x1xf32> to vector<24x32xf32>
    %4 = arith.subf %0, %3 : vector<24x32xf32>
    %5 = math.exp %4 : vector<24x32xf32>
    %cst_1 = arith.constant dense<0.000000e+00> : vector<24xf32>
    %6 = vector.multi_reduction <add>, %5, %cst_1 [1] : vector<24x32xf32> to vector<24xf32>
    %7 = vector.shape_cast %6 : vector<24xf32> to vector<24x1xf32>
    %cst_2 = arith.constant 1.000000e+00 : f32
    %8 = vector.broadcast %cst_2 : f32 to vector<24x1xf32>
    %9 = arith.divf %8, %7 : vector<24x1xf32>
    %10 = vector.broadcast %9 : vector<24x1xf32> to vector<24x32xf32>
    %11 = arith.mulf %5, %10 : vector<24x32xf32>
    %c0_3 = arith.constant 0 : index
    %c0_4 = arith.constant 0 : index
    %12 = vector.load %arg4[%c0_3, %c0_4] : memref<24x32xf32, #tpu.memory_space<vmem>>, vector<24x32xf32>
    %cst_5 = arith.constant dense<0xFF800000> : vector<24xf32>
    %13 = vector.multi_reduction <maximumf>, %12, %cst_5 [1] : vector<24x32xf32> to vector<24xf32>
    %14 = vector.shape_cast %13 : vector<24xf32> to vector<24x1xf32>
    %15 = vector.broadcast %14 : vector<24x1xf32> to vector<24x32xf32>
    %16 = arith.subf %12, %15 : vector<24x32xf32>
    %17 = math.exp %16 : vector<24x32xf32>
    %cst_6 = arith.constant dense<0.000000e+00> : vector<24xf32>
    %18 = vector.multi_reduction <add>, %17, %cst_6 [1] : vector<24x32xf32> to vector<24xf32>
    %19 = vector.shape_cast %18 : vector<24xf32> to vector<24x1xf32>
    %cst_7 = arith.constant 1.000000e+00 : f32
    %20 = vector.broadcast %cst_7 : f32 to vector<24x1xf32>
    %21 = arith.divf %20, %19 : vector<24x1xf32>
    %22 = vector.broadcast %21 : vector<24x1xf32> to vector<24x32xf32>
    %23 = arith.mulf %17, %22 : vector<24x32xf32>
    %24 = arith.addf %11, %23 : vector<24x32xf32>
    %c0_8 = arith.constant 0 : index
    %c0_9 = arith.constant 0 : index
    %25 = vector.load %arg5[%c0_8, %c0_9] : memref<24x32xf32, #tpu.memory_space<vmem>>, vector<24x32xf32>
    %cst_10 = arith.constant dense<0xFF800000> : vector<24xf32>
    %26 = vector.multi_reduction <maximumf>, %25, %cst_10 [1] : vector<24x32xf32> to vector<24xf32>
    %27 = vector.shape_cast %26 : vector<24xf32> to vector<24x1xf32>
    %28 = vector.broadcast %27 : vector<24x1xf32> to vector<24x32xf32>
    %29 = arith.subf %25, %28 : vector<24x32xf32>
    %30 = math.exp %29 : vector<24x32xf32>
    %cst_11 = arith.constant dense<0.000000e+00> : vector<24xf32>
    %31 = vector.multi_reduction <add>, %30, %cst_11 [1] : vector<24x32xf32> to vector<24xf32>
    %32 = vector.shape_cast %31 : vector<24xf32> to vector<24x1xf32>
    %cst_12 = arith.constant 1.000000e+00 : f32
    %33 = vector.broadcast %cst_12 : f32 to vector<24x1xf32>
    %34 = arith.divf %33, %32 : vector<24x1xf32>
    %35 = vector.broadcast %34 : vector<24x1xf32> to vector<24x32xf32>
    %36 = arith.mulf %30, %35 : vector<24x32xf32>
    %37 = arith.addf %24, %36 : vector<24x32xf32>
    %c0_13 = arith.constant 0 : index
    %c0_14 = arith.constant 0 : index
    %38 = vector.load %arg1[%c0_13, %c0_14] : memref<24x32xf32, #tpu.memory_space<vmem>>, vector<24x32xf32>
    %cst_15 = arith.constant dense<0xFF800000> : vector<24xf32>
    %39 = vector.multi_reduction <maximumf>, %38, %cst_15 [1] : vector<24x32xf32> to vector<24xf32>
    %40 = vector.shape_cast %39 : vector<24xf32> to vector<24x1xf32>
    %41 = vector.broadcast %40 : vector<24x1xf32> to vector<24x32xf32>
    %42 = arith.subf %38, %41 : vector<24x32xf32>
    %43 = math.exp %42 : vector<24x32xf32>
    %cst_16 = arith.constant dense<0.000000e+00> : vector<24xf32>
    %44 = vector.multi_reduction <add>, %43, %cst_16 [1] : vector<24x32xf32> to vector<24xf32>
    %45 = vector.shape_cast %44 : vector<24xf32> to vector<24x1xf32>
    %cst_17 = arith.constant 3.000000e+00 : f32
    %46 = vector.broadcast %cst_17 : f32 to vector<24x1xf32>
    %47 = arith.divf %46, %45 : vector<24x1xf32>
    %48 = vector.broadcast %47 : vector<24x1xf32> to vector<24x32xf32>
    %49 = arith.mulf %43, %48 : vector<24x32xf32>
    %50 = arith.subf %49, %37 : vector<24x32xf32>
    %51 = arith.mulf %50, %50 : vector<24x32xf32>
    %cst_18 = arith.constant dense<0.000000e+00> : vector<24xf32>
    %52 = vector.multi_reduction <add>, %51, %cst_18 [1] : vector<24x32xf32> to vector<24xf32>
    %53 = vector.shape_cast %52 : vector<24xf32> to vector<24x1xf32>
    %c0_19 = arith.constant 0 : index
    %c0_20 = arith.constant 0 : index
    %54 = vector.load %arg2[%c0_19, %c0_20] : memref<24x1xf32, #tpu.memory_space<vmem>>, vector<24x1xf32>
    %c24_i32 = arith.constant 24 : i32
    %55 = arith.muli %arg0, %c24_i32 : i32
    %56 = tpu.iota {dimensions = array<i32: 0>} : vector<24x1xi32>
    %57 = vector.broadcast %55 : i32 to vector<24x1xi32>
    %58 = arith.addi %57, %56 : vector<24x1xi32>
    %c20_i32 = arith.constant 20 : i32
    %59 = vector.broadcast %c20_i32 : i32 to vector<24x1xi32>
    %60 = arith.cmpi slt, %58, %59 : vector<24x1xi32>
    %cst_21 = arith.constant 0.00347222225 : f32
    %61 = vector.broadcast %cst_21 : f32 to vector<24x1xf32>
    %62 = arith.mulf %54, %61 : vector<24x1xf32>
    %63 = arith.mulf %53, %62 : vector<24x1xf32>
    %cst_22 = arith.constant 0.000000e+00 : f32
    %64 = vector.broadcast %cst_22 : f32 to vector<24x1xf32>
    %65 = arith.select %60, %63, %64 : vector<24x1xi1>, vector<24x1xf32>
    %cst_23 = arith.constant 0.000000e+00 : f32
    %66 = vector.broadcast %cst_23 : f32 to vector<24x1xf32>
    %67 = arith.cmpf ogt, %54, %66 : vector<24x1xf32>
    %68 = arith.andi %60, %67 : vector<24x1xi1>
    %69 = arith.extui %68 : vector<24x1xi1> to vector<24x1xi32>
    %70 = vector.shape_cast %65 : vector<24x1xf32> to vector<1x24x1xf32>
    %cst_24 = arith.constant dense<0.000000e+00> : vector<1xf32>
    %71 = vector.multi_reduction <add>, %70, %cst_24 [1, 2] : vector<1x24x1xf32> to vector<1xf32>
    %72 = vector.shape_cast %71 : vector<1xf32> to vector<1x1x1xf32>
    %73 = vector.extract %72[0, 0, 0] : f32 from vector<1x1x1xf32>
    %74 = vector.broadcast %73 : f32 to vector<1x1x128xf32>
    %c0_25 = arith.constant 0 : index
    %c0_26 = arith.constant 0 : index
    %c0_27 = arith.constant 0 : index
    %75 = vector.load %arg6[%c0_25, %c0_26, %c0_27] : memref<1x1x128xf32, #tpu.memory_space<vmem>>, vector<1x1x128xf32>
    tpu.vector_store %arg6[%c0_25, %c0_26, %c0_27], %74 {strides = array<i32>} : memref<1x1x128xf32, #tpu.memory_space<vmem>>, vector<1x1x128xf32>,
    %76 = vector.shape_cast %69 : vector<24x1xi32> to vector<1x24x1xi32>
    %cst_28 = arith.constant dense<0> : vector<1xi32>
    %77 = vector.multi_reduction <add>, %76, %cst_28 [1, 2] : vector<1x24x1xi32> to vector<1xi32>
    %78 = vector.shape_cast %77 : vector<1xi32> to vector<1x1x1xi32>
    %79 = vector.extract %78[0, 0, 0] : i32 from vector<1x1x1xi32>
    %80 = vector.broadcast %79 : i32 to vector<1x1x128xi32>
    %c0_29 = arith.constant 0 : index
    %c0_30 = arith.constant 0 : index
    %c0_31 = arith.constant 0 : index
    %81 = vector.load %arg7[%c0_29, %c0_30, %c0_31] : memref<1x1x128xi32, #tpu.memory_space<vmem>>, vector<1x1x128xi32>
    tpu.vector_store %arg7[%c0_29, %c0_30, %c0_31], %80 {strides = array<i32>} : memref<1x1x128xi32, #tpu.memory_space<vmem>>, vector<1x1x128xi32>,
    return
  }
  func.func @transform_0(%arg0: i32) -> (i32, i32) {
    %c0_i32 = arith.constant 0 : i32
    %c0_i32_0 = arith.constant 0 : i32
    return %arg0, %c0_i32 : i32, i32
  }
  func.func @transform_1(%arg0: i32) -> (i32, i32) {
    %c0_i32 = arith.constant 0 : i32
    %c0_i32_0 = arith.constant 0 : i32
    return %arg0, %c0_i32 : i32, i32
  }
  func.func @transform_2(%arg0: i32) -> (i32, i32) {
    %c0_i32 = arith.constant 0 : i32
    %c0_i32_0 = arith.constant 0 : i32
    return %arg0, %c0_i32 : i32, i32
  }
  func.func @transform_3(%arg0: i32) -> (i32, i32) {
    %c0_i32 = arith.constant 0 : i32
    %c0_i32_0 = arith.constant 0 : i32
    return %arg0, %c0_i32 : i32, i32
  }
  func.func @transform_4(%arg0: i32) -> (i32, i32) {
    %c0_i32 = arith.constant 0 : i32
    %c0_i32_0 = arith.constant 0 : i32
    return %arg0, %c0_i32 : i32, i32
  }
  func.func @transform_5(%arg0: i32) -> (i32, i32, i32) {
    %c0_i32 = arith.constant 0 : i32
    %c0_i32_0 = arith.constant 0 : i32
    %c0_i32_1 = arith.constant 0 : i32
    return %arg0, %c0_i32, %c0_i32_0 : i32, i32, i32
  }
  func.func @transform_6(%arg0: i32) -> (i32, i32, i32) {
    %c0_i32 = arith.constant 0 : i32
    %c0_i32_0 = arith.constant 0 : i32
    %c0_i32_1 = arith.constant 0 : i32
    return %arg0, %c0_i32, %c0_i32_0 : i32, i32, i32
  }
}

</mosaic_0001>

<llo_original>
// kernel: tpu_custom_call.1
$region0: #{tpu_custom_call.1}
  #allocation0 [shape = 'u32[]', space=smem, size = 0x4, offset = 0x4, fixed_abs, tag = 'smem constant byte address 0x4 - core index']
  #allocation1 [shape = 'u32[144,128]{1,0:T(1,128)}', space=vmem, size = 0x12000, scoped, tag = 'internal scratch']
  %s0 = inlined_call_operand.vmem [shape: f32[20,32], index: 0, kind: input, shape index: {}]
  %s1 = inlined_call_operand.vmem [shape: f32[20,1], index: 1, kind: input, shape index: {}]
  %s2 = inlined_call_operand.hbm [shape: f32[20,32], index: 2, kind: input, shape index: {}]
  %s3 = inlined_call_operand.hbm [shape: f32[20,32], index: 3, kind: input, shape index: {}]
  %s4 = inlined_call_operand.hbm [shape: f32[20,32], index: 4, kind: input, shape index: {}]
  %s5 = inlined_call_operand.hbm [shape: f32[1,1,128], index: 5, kind: output, shape index: {0}]
  %s6 = inlined_call_operand.hbm [shape: s32[1,1,128], index: 6, kind: output, shape index: {1}]
  %7 = xla_tuple %s5, %s6
  %s8 = sld [smem:[#allocation0]]
  $region50: #{tpu_custom_call.1} parent=0
    _
  %s10 = ssub.s32 1, %s8
  %s11 = scalar_select 0, %s10, %s8
  $region1: #{tpu_custom_call.1} parent=0
    #allocation2 [shape = 'u8[12288]{0}', space=vmem, size = 0x3000, scoped, tag = 'input window, operand 2, single buffered']
    #allocation3 [shape = 's32[1]{0}', space=sflag, size = 0x4, scoped, tag = 'scoped memory for tpu_custom_call.1']
    #allocation4 [shape = 's32[1]{0}', space=sflag, size = 0x4, scoped, tag = 'scoped memory for tpu_custom_call.1']
    #allocation5 [shape = 'u8[12288]{0}', space=vmem, size = 0x3000, scoped, tag = 'input window, operand 3, single buffered']
    #allocation6 [shape = 's32[1]{0}', space=sflag, size = 0x4, scoped, tag = 'scoped memory for tpu_custom_call.1']
    #allocation7 [shape = 'u8[12288]{0}', space=vmem, size = 0x3000, scoped, tag = 'input window, operand 4, single buffered']
    #allocation8 [shape = 'u8[512]{0}', space=vmem, size = 0x400, scoped, tag = 'output window, operand 0, single buffered']
    #allocation9 [shape = 'u8[512]{0}', space=vmem, size = 0x400, scoped, tag = 'output window, operand 1, single buffered']
    #allocation10 [shape = 's32[1]{0}', space=sflag, size = 0x4, scoped, tag = 'scoped memory for tpu_custom_call.1']
    %12 = vsyncpa [#allocation3], 0
    %13 = vsyncpa [#allocation6], 0
    %14 = vsyncpa [#allocation4], 0
    %15 = vsyncpa [#allocation10], 0
    // Predicated region
    $region2: #{tpu_custom_call.1} parent=1 // pred_check
      _
    $region3: #{tpu_custom_call.1} parent=1 // pred_check_branch
      %17 = sbr.rel (0) target = $region5
    $region4: #{tpu_custom_call.1} parent=1 // pred_region
      _
    $region5: #{tpu_custom_call.1} parent=1 // pred_fallthru
      _
    // Predicated region
    $region6: #{tpu_custom_call.1} parent=1 // pred_check
      _
    $region7: #{tpu_custom_call.1} parent=1 // pred_check_branch
      %19 = sbr.rel (0) target = $region9
    $region8: #{tpu_custom_call.1} parent=1 // pred_region
      _
    $region9: #{tpu_custom_call.1} parent=1 // pred_fallthru
      _
    // Predicated region
    $region10: #{tpu_custom_call.1} parent=1 // pred_check
      _
    $region11: #{tpu_custom_call.1} parent=1 // pred_check_branch
      %21 = sbr.rel (0) target = $region13
    $region12: #{tpu_custom_call.1} parent=1 // pred_region
      %s23 = ssub.s32 384, 384
      %24 = vsyncadd [#allocation3], %s23
      %s25 = sshll.u32 [#allocation2], 4
      %s26 = int_to_ptr.vmem [resolvable:$true] %s25
      %31 = dma.hbm_to_vmem [thread:$0]  %s2, 384, %s26, [#allocation3], 128, 128, 8
    $region13: #{tpu_custom_call.1} parent=1 // pred_fallthru
      _
    // Predicated region
    $region14: #{tpu_custom_call.1} parent=1 // pred_check
      _
    $region15: #{tpu_custom_call.1} parent=1 // pred_check_branch
      %33 = sbr.rel (0) target = $region17
    $region16: #{tpu_custom_call.1} parent=1 // pred_region
      %s35 = ssub.s32 384, 384
      %36 = vsyncadd [#allocation6], %s35
      %s37 = sshll.u32 [#allocation5], 4
      %s38 = int_to_ptr.vmem [resolvable:$true] %s37
      %43 = dma.hbm_to_vmem [thread:$0]  %s3, 384, %s38, [#allocation6], 128, 128, 8
    $region17: #{tpu_custom_call.1} parent=1 // pred_fallthru
      _
    // Predicated region
    $region18: #{tpu_custom_call.1} parent=1 // pred_check
      _
    $region19: #{tpu_custom_call.1} parent=1 // pred_check_branch
      %45 = sbr.rel (0) target = $region21
    $region20: #{tpu_custom_call.1} parent=1 // pred_region
      %s47 = ssub.s32 384, 384
      %48 = vsyncadd [#allocation6], %s47
      %s49 = sshll.u32 [#allocation7], 4
      %s50 = int_to_ptr.vmem [resolvable:$true] %s49
      %55 = dma.hbm_to_vmem [thread:$0]  %s4, 384, %s50, [#allocation6], 128, 128, 8
    $region21: #{tpu_custom_call.1} parent=1 // pred_fallthru
      _
    // Predicated region
    $region22: #{tpu_custom_call.1} parent=1 // pred_check
      _
    $region23: #{tpu_custom_call.1} parent=1 // pred_check_branch
      %57 = sbr.rel (0) target = $region25
    $region24: #{tpu_custom_call.1} parent=1 // pred_region
      %58 = dma.done [#allocation3], 384
    $region25: #{tpu_custom_call.1} parent=1 // pred_fallthru
      _
    // Predicated region
    $region26: #{tpu_custom_call.1} parent=1 // pred_check
      _
    $region27: #{tpu_custom_call.1} parent=1 // pred_check_branch
      %60 = sbr.rel (0) target = $region29
    $region28: #{tpu_custom_call.1} parent=1 // pred_region
      %61 = dma.done [#allocation6], 384
    $region29: #{tpu_custom_call.1} parent=1 // pred_fallthru
      _
    // Predicated region
    $region30: #{tpu_custom_call.1} parent=1 // pred_check
      _
    $region31: #{tpu_custom_call.1} parent=1 // pred_check_branch
      %63 = sbr.rel (0) target = $region33
    $region32: #{tpu_custom_call.1} parent=1 // pred_region
      %64 = dma.done [#allocation6], 384
    $region33: #{tpu_custom_call.1} parent=1 // pred_fallthru
      _
    %v65 = vld [vmem:[#allocation2] sm:$0xff]
    %v66 = vld [vmem:[#allocation2 + $0x8] sm:$0xff]
    %v67 = vld [vmem:[#allocation2 + $0x10] sm:$0xff]
    %vm68 = vcmask 261120
    %v69 = vsel %vm68, %v65, -inf
    %70 = vmax.xlane.f32.xlu0 %v69
    %v71 = vpop.xlane.xlu0 %70
    %v72 = vsel %vm68, %v66, -inf
    %73 = vmax.xlane.f32.xlu0 %v72
    %v74 = vpop.xlane.xlu0 %73
    %v75 = vsel %vm68, %v67, -inf
    %76 = vmax.xlane.f32.xlu0 %v75
    %v77 = vpop.xlane.xlu0 %76
    %v78 = vsub.f32 %v65, %v71
    %v79 = vsub.f32 %v66, %v74
    %v80 = vsub.f32 %v67, %v77
    %v81 = vmul.f32 %v78, 1.442695
    %v82 = vpow.pop %v81
    %v83 = vmul.f32 %v79, 1.442695
    %v84 = vpow.pop %v83
    %v85 = vmul.f32 %v80, 1.442695
    %v86 = vpow.pop %v85
    %v87 = vsel %vm68, %v82, 0.0
    %88 = vadd.xlane.f32.xlu0 %v87
    %v89 = vpop.xlane.xlu0 %88
    %v90 = vsel %vm68, %v84, 0.0
    %91 = vadd.xlane.f32.xlu0 %v90
    %v92 = vpop.xlane.xlu0 %91
    %v93 = vsel %vm68, %v86, 0.0
    %94 = vadd.xlane.f32.xlu0 %v93
    %v95 = vpop.xlane.xlu0 %94
    %v96 = vrcp.pop %v89
    %v97 = vmul.f32 1.0, %v96
    %v98 = vrcp.pop %v92
    %v99 = vmul.f32 1.0, %v98
    %v100 = vrcp.pop %v95
    %v101 = vmul.f32 1.0, %v100
    %v102 = vmul.f32 %v82, %v97
    %v103 = vmul.f32 %v84, %v99
    %v104 = vmul.f32 %v86, %v101
    %v105 = vld [vmem:[#allocation5] sm:$0xff]
    %v106 = vld [vmem:[#allocation5 + $0x8] sm:$0xff]
    %v107 = vld [vmem:[#allocation5 + $0x10] sm:$0xff]
    %v108 = vsel %vm68, %v105, -inf
    %109 = vmax.xlane.f32.xlu0 %v108
    %v110 = vpop.xlane.xlu0 %109
    %v111 = vsel %vm68, %v106, -inf
    %112 = vmax.xlane.f32.xlu0 %v111
    %v113 = vpop.xlane.xlu0 %112
    %v114 = vsel %vm68, %v107, -inf
    %115 = vmax.xlane.f32.xlu0 %v114
    %v116 = vpop.xlane.xlu0 %115
    %v117 = vsub.f32 %v105, %v110
    %v118 = vsub.f32 %v106, %v113
    %v119 = vsub.f32 %v107, %v116
    %v120 = vmul.f32 %v117, 1.442695
    %v121 = vpow.pop %v120
    %v122 = vmul.f32 %v118, 1.442695
    %v123 = vpow.pop %v122
    %v124 = vmul.f32 %v119, 1.442695
    %v125 = vpow.pop %v124
    %v126 = vsel %vm68, %v121, 0.0
    %127 = vadd.xlane.f32.xlu0 %v126
    %v128 = vpop.xlane.xlu0 %127
    %v129 = vsel %vm68, %v123, 0.0
    %130 = vadd.xlane.f32.xlu0 %v129
    %v131 = vpop.xlane.xlu0 %130
    %v132 = vsel %vm68, %v125, 0.0
    %133 = vadd.xlane.f32.xlu0 %v132
    %v134 = vpop.xlane.xlu0 %133
    %v135 = vrcp.pop %v128
    %v136 = vmul.f32 1.0, %v135
    %v137 = vrcp.pop %v131
    %v138 = vmul.f32 1.0, %v137
    %v139 = vrcp.pop %v134
    %v140 = vmul.f32 1.0, %v139
    %v141 = vmul.f32 %v121, %v136
    %v142 = vmul.f32 %v123, %v138
    %v143 = vmul.f32 %v125, %v140
    %v144 = vadd.f32 %v102, %v141
    %v145 = vadd.f32 %v103, %v142
    %v146 = vadd.f32 %v104, %v143
    %v147 = vld [vmem:[#allocation7] sm:$0xff]
    %v148 = vld [vmem:[#allocation7 + $0x8] sm:$0xff]
    %v149 = vld [vmem:[#allocation7 + $0x10] sm:$0xff]
    %v150 = vsel %vm68, %v147, -inf
    %151 = vmax.xlane.f32.xlu0 %v150
    %v152 = vpop.xlane.xlu0 %151
    %v153 = vsel %vm68, %v148, -inf
    %154 = vmax.xlane.f32.xlu0 %v153
    %v155 = vpop.xlane.xlu0 %154
    %v156 = vsel %vm68, %v149, -inf
    %157 = vmax.xlane.f32.xlu0 %v156
    %v158 = vpop.xlane.xlu0 %157
    %v159 = vsub.f32 %v147, %v152
    %v160 = vsub.f32 %v148, %v155
    %v161 = vsub.f32 %v149, %v158
    %v162 = vmul.f32 %v159, 1.442695
    %v163 = vpow.pop %v162
    %v164 = vmul.f32 %v160, 1.442695
    %v165 = vpow.pop %v164
    %v166 = vmul.f32 %v161, 1.442695
    %v167 = vpow.pop %v166
    %v168 = vsel %vm68, %v163, 0.0
    %169 = vadd.xlane.f32.xlu0 %v168
    %v170 = vpop.xlane.xlu0 %169
    %v171 = vsel %vm68, %v165, 0.0
    %172 = vadd.xlane.f32.xlu0 %v171
    %v173 = vpop.xlane.xlu0 %172
    %v174 = vsel %vm68, %v167, 0.0
    %175 = vadd.xlane.f32.xlu0 %v174
    %v176 = vpop.xlane.xlu0 %175
    %v177 = vrcp.pop %v170
    %v178 = vmul.f32 1.0, %v177
    %v179 = vrcp.pop %v173
    %v180 = vmul.f32 1.0, %v179
    %v181 = vrcp.pop %v176
    %v182 = vmul.f32 1.0, %v181
    %v183 = vmul.f32 %v163, %v178
    %v184 = vmul.f32 %v165, %v180
    %v185 = vmul.f32 %v167, %v182
    %v186 = vadd.f32 %v144, %v183
    %v187 = vadd.f32 %v145, %v184
    %v188 = vadd.f32 %v146, %v185
    %v189 = vld [vmem:[%s0] sm:$0xff]
    %v190 = vld [vmem:[%s0 + $0x8] sm:$0xff]
    %v191 = vld [vmem:[%s0 + $0x10] sm:$0xff]
    %v192 = vsel %vm68, %v189, -inf
    %193 = vmax.xlane.f32.xlu0 %v192
    %v194 = vpop.xlane.xlu0 %193
    %v195 = vsel %vm68, %v190, -inf
    %196 = vmax.xlane.f32.xlu0 %v195
    %v197 = vpop.xlane.xlu0 %196
    %v198 = vsel %vm68, %v191, -inf
    %199 = vmax.xlane.f32.xlu0 %v198
    %v200 = vpop.xlane.xlu0 %199
    %v201 = vsub.f32 %v189, %v194
    %v202 = vsub.f32 %v190, %v197
    %v203 = vsub.f32 %v191, %v200
    %v204 = vmul.f32 %v201, 1.442695
    %v205 = vpow.pop %v204
    %v206 = vmul.f32 %v202, 1.442695
    %v207 = vpow.pop %v206
    %v208 = vmul.f32 %v203, 1.442695
    %v209 = vpow.pop %v208
    %v210 = vsel %vm68, %v205, 0.0
    %211 = vadd.xlane.f32.xlu0 %v210
    %v212 = vpop.xlane.xlu0 %211
    %v213 = vsel %vm68, %v207, 0.0
    %214 = vadd.xlane.f32.xlu0 %v213
    %v215 = vpop.xlane.xlu0 %214
    %v216 = vsel %vm68, %v209, 0.0
    %217 = vadd.xlane.f32.xlu0 %v216
    %v218 = vpop.xlane.xlu0 %217
    %v219 = vrcp.pop %v212
    %v220 = vmul.f32 3.0, %v219
    %v221 = vrcp.pop %v215
    %v222 = vmul.f32 3.0, %v221
    %v223 = vrcp.pop %v218
    %v224 = vmul.f32 3.0, %v223
    %v225 = vmul.f32 %v205, %v220
    %v226 = vmul.f32 %v207, %v222
    %v227 = vmul.f32 %v209, %v224
    %v228 = vsub.f32 %v225, %v186
    %v229 = vsub.f32 %v226, %v187
    %v230 = vsub.f32 %v227, %v188
    %v231 = vmul.f32 %v228, %v228
    %v232 = vmul.f32 %v229, %v229
    %v233 = vmul.f32 %v230, %v230
    %v234 = vsel %vm68, %v231, 0.0
    %235 = vadd.xlane.f32.xlu0 %v234
    %v236 = vpop.xlane.xlu0 %235
    %v237 = vsel %vm68, %v232, 0.0
    %238 = vadd.xlane.f32.xlu0 %v237
    %v239 = vpop.xlane.xlu0 %238
    %v240 = vsel %vm68, %v233, 0.0
    %241 = vadd.xlane.f32.xlu0 %v240
    %v242 = vpop.xlane.xlu0 %241
    %v243 = vld [vmem:[%s1] sm:$0xff]
    %v244 = vld [vmem:[%s1 + $0x8] sm:$0xff]
    %v245 = vld [vmem:[%s1 + $0x10] sm:$0xff]
    %s246 = smul.u32 0, 24
    %v247 = vlaneseq
    %v248 = vshrl.u32 %v247, 7
    %v249 = vadd.s32 %v248, 8
    %v250 = vadd.s32 %v248, 16
    %v251 = vstv %s246
    %v252 = vadd.s32 %v251, %v248
    %v253 = vadd.s32 %v251, %v249
    %v254 = vadd.s32 %v251, %v250
    %vm255 = vcmp.lt.s32.totalorder %v252, 20
    %vm256 = vcmp.lt.s32.totalorder %v253, 20
    %vm257 = vcmp.lt.s32.totalorder %v254, 20
    %v258 = vmul.f32 %v243, 0.0034722222
    %v259 = vmul.f32 %v244, 0.0034722222
    %v260 = vmul.f32 %v245, 0.0034722222
    %v261 = vmul.f32 %v236, %v258
    %v262 = vmul.f32 %v239, %v259
    %v263 = vmul.f32 %v242, %v260
    %v264 = vsel %vm255, %v261, 0.0
    %v265 = vsel %vm256, %v262, 0.0
    %v266 = vsel %vm257, %v263, 0.0
    %vm267 = vcmp.gt.f32.partialorder %v243, 0.0
    %vm268 = vcmp.gt.f32.partialorder %v244, 0.0
    %vm269 = vcmp.gt.f32.partialorder %v245, 0.0
    %vm270 = vmand %vm255, %vm267
    %vm271 = vmand %vm256, %vm268
    %vm272 = vmand %vm257, %vm269
    %v273 = vsel %vm270, 1, 0
    %v274 = vsel %vm271, 1, 0
    %v275 = vsel %vm272, 1, 0
    %vm276 = vcmask 7168
    %v277 = vsel %vm276, %v264, 0.0
    %v278 = vsel %vm276, %v265, 0.0
    %v279 = vadd.f32 %v277, %v278
    %v280 = vsel %vm276, %v266, 0.0
    %v281 = vadd.f32 %v279, %v280
    %282 = vadd.xlane.f32.xlu0 %v281
    %v283 = vpop.xlane.xlu0 %282
    %v284 = vrot.slane %v283, 4
    %v285 = vadd.f32 %v283, %v284
    %v286 = vrot.slane %v285, 2
    %v287 = vadd.f32 %v285, %v286
    %v288 = vrot.slane %v287, 1
    %v289 = vadd.f32 %v287, %v288
    %s290 = vtos %v289
    %v291 = vstv %s290
    %292 = vst [vmem:[#allocation8] sm:$0x1] %v291
    %v293 = vsel %vm276, %v273, 0
    %v294 = vsel %vm276, %v274, 0
    %v295 = vsel %vm276, %v275, 0
    %v296 = vadd.s32 %v293, %v294
    %v297 = vadd.s32 %v296, %v295
    %v298 = vand.u32 %v297, 65535
    %v299 = vshrl.u32 %v297, 16
    %v300 = vcvt.s32.f32 %v298
    %v301 = vcvt.s32.f32 %v299
    %302 = vadd.xlane.f32.xlu0 %v300
    %v303 = vpop.xlane.xlu0 %302
    %304 = vadd.xlane.f32.xlu0 %v301
    %v305 = vpop.xlane.xlu0 %304
    %v306 = vcvt.f32.s32 %v303
    %v307 = vcvt.f32.s32 %v305
    %v308 = vshll.u32 %v307, 16
    %v309 = vadd.s32 %v308, %v306
    %v310 = vrot.slane %v309, 4
    %v311 = vadd.s32 %v309, %v310
    %v312 = vrot.slane %v311, 2
    %v313 = vadd.s32 %v311, %v312
    %v314 = vrot.slane %v313, 1
    %v315 = vadd.s32 %v313, %v314
    %s316 = vtos %v315
    %v317 = vstv %s316
    %318 = vst [vmem:[#allocation9] sm:$0x1] %v317
    // Predicated region
    $region34: #{tpu_custom_call.1} parent=1 // pred_check
      _
    $region35: #{tpu_custom_call.1} parent=1 // pred_check_branch
      %320 = sbr.rel (0) target = $region37
    $region36: #{tpu_custom_call.1} parent=1 // pred_region
      %s322 = ssub.s32 16, 16
      %323 = vsyncadd [#allocation4], %s322
      %s325 = sshll.u32 [#allocation8], 4
      %s326 = int_to_ptr.vmem [resolvable:$true] %s325
      %328 = dma.vmem_to_hbm [thread:$0]  %s326, 16, %s5, [#allocation4]
    $region37: #{tpu_custom_call.1} parent=1 // pred_fallthru
      _
    // Predicated region
    $region38: #{tpu_custom_call.1} parent=1 // pred_check
      _
    $region39: #{tpu_custom_call.1} parent=1 // pred_check_branch
      %330 = sbr.rel (0) target = $region41
    $region40: #{tpu_custom_call.1} parent=1 // pred_region
      %s332 = ssub.s32 16, 16
      %333 = vsyncadd [#allocation10], %s332
      %s335 = sshll.u32 [#allocation9], 4
      %s336 = int_to_ptr.vmem [resolvable:$true] %s335
      %338 = dma.vmem_to_hbm [thread:$0]  %s336, 16, %s6, [#allocation10]
    $region41: #{tpu_custom_call.1} parent=1 // pred_fallthru
      _
    // Predicated region
    $region42: #{tpu_custom_call.1} parent=1 // pred_check
      _
    $region43: #{tpu_custom_call.1} parent=1 // pred_check_branch
      %340 = sbr.rel (0) target = $region45
    $region44: #{tpu_custom_call.1} parent=1 // pred_region
      %341 = dma.done [#allocation4], 16
    $region45: #{tpu_custom_call.1} parent=1 // pred_fallthru
      _
    // Predicated region
    $region46: #{tpu_custom_call.1} parent=1 // pred_check
      _
    $region47: #{tpu_custom_call.1} parent=1 // pred_check_branch
      %343 = sbr.rel (0) target = $region49
    $region48: #{tpu_custom_call.1} parent=1 // pred_region
      %344 = dma.done [#allocation10], 16
    $region49: #{tpu_custom_call.1} parent=1 // pred_fallthru
      _
    %345 = vsyncpa [#allocation3], 1
    %346 = vsyncpa [#allocation6], 1
    %347 = vsyncpa [#allocation4], 1
    %348 = vsyncpa [#allocation10], 1

</llo_original>
